<compile_context>
chip_gen: v6e
topology: v6e:2x2x1
jax: 0.10.0
libtpu: 0.0.40
codegen_flags: <defaults>
</compile_context>

<pallas_src>
import functools

import jax
import jax.numpy as jnp
from jax.experimental import pallas as pl
from jax.experimental.pallas import tpu as pltpu

LANE = 128   # channel / output dims are zero-padded to a full 128-lane width


# ------------------------------ fused kernels ------------------------------

def _conv_pool_row(patches_ref, wc_ref, bc_ref, pool_ref, *, hw_pad, tile_hw, inv_hw):
    """conv3x3(+bias,+ReLU) and global-avg-pool for the current batch slab.

    patches_ref : (1, hw_pad, 9*Cin) bf16   im2col patches of this batch
    wc_ref      : (9*Cin, 128)       bf16   conv weights (Cout zero-padded)
    bc_ref      : (1, 128)           f32    conv bias   (zero-padded)
    pool_ref    : (1, hw_pad)        bf16   1.0 on real pixels, 0.0 on pad rows
    returns       (1, 128) f32 pooled features; lanes >= Cout are exactly 0.
    """
    pooled = jnp.zeros((1, LANE), jnp.float32)
    for t in range(hw_pad // tile_hw):                      # static, small
        s = t * tile_hw                                     # multiple of 8 -> aligned
        tap = patches_ref[0, s:s + tile_hw, :]              # (tile, 9*Cin) bf16
        acc = jnp.dot(tap, wc_ref[...], preferred_element_type=jnp.float32)
        act = jnp.maximum(acc + bc_ref[...], 0.0)           # (tile, 128) f32
        # fold this tile straight into the pooled accumulator (rides the MXU)
        pooled = pooled + jnp.dot(pool_ref[:, s:s + tile_hw],
                                  act.astype(jnp.bfloat16),
                                  preferred_element_type=jnp.float32)
    return pooled * inv_hw                                  # (1, 128) f32


def _eval_kernel(patches_ref, wc_ref, bc_ref, pool_ref, wfc_ref, bfc_ref,
                 pred_ref, pooled_sc, *, hw_pad, tile_hw, inv_hw):
    b = pl.program_id(0)
    pooled_sc[pl.ds(b, 1), :] = _conv_pool_row(
        patches_ref, wc_ref, bc_ref, pool_ref,
        hw_pad=hw_pad, tile_hw=tile_hw, inv_hw=inv_hw)

    # batched FC head: one (N,128)@(128,128) matmul on the last grid step
    @pl.when(b == pl.num_programs(0) - 1)
    def _():
        pred_ref[...] = (jnp.dot(pooled_sc[...].astype(jnp.bfloat16), wfc_ref[...],
                                 preferred_element_type=jnp.float32)
                         + bfc_ref[...])


def _train_kernel(patches_ref, wc_ref, bc_ref, pool_ref, wfc_ref, bfc_ref, tgt_ref,
                  loss_ref, pooled_sc, *, hw_pad, tile_hw, inv_hw, n, num_out):
    b = pl.program_id(0)
    pooled_sc[pl.ds(b, 1), :] = _conv_pool_row(
        patches_ref, wc_ref, bc_ref, pool_ref,
        hw_pad=hw_pad, tile_hw=tile_hw, inv_hw=inv_hw)

    @pl.when(b == pl.num_programs(0) - 1)
    def _():
        pred = (jnp.dot(pooled_sc[...].astype(jnp.bfloat16), wfc_ref[...],
                        preferred_element_type=jnp.float32)
                + bfc_ref[...])                              # (N, 128)
        d = pred - tgt_ref[...]                              # padded cols exactly 0
        # single cross-lane/sublane reduce over the whole padded block
        sq = jnp.sum(d * d, axis=(0, 1), keepdims=True)      # (1, 1)
        # mean over the real (N, num_out) entries == nn.MSELoss(reduction='mean')
        loss_ref[...] = sq * (1.0 / (n * num_out))


# --------------------------- parameter / input prep ---------------------------

def init_params(key, cin=4, cout=8, num_out=5):
    k1, k2, k3, k4 = jax.random.split(key, 4)
    return {
        "conv_w": 0.1 * jax.random.normal(k1, (cout, cin, 3, 3), jnp.float32),
        "conv_b": 0.1 * jax.random.normal(k2, (cout,), jnp.float32),
        "fc_w":   0.1 * jax.random.normal(k3, (num_out, cout), jnp.float32),
        "fc_b":   0.1 * jax.random.normal(k4, (num_out,), jnp.float32),
    }


def _prepare_inputs(x_nchw, params):
    n, cin, h, w = x_nchw.shape
    cout = params["conv_w"].shape[0]
    num_out = params["fc_w"].shape[0]
    hw = h * w

    # spatial tile for the in-kernel conv/pool loop (multiple of 8 -> aligned slices)
    tile_hw = min(256, ((hw + 7) // 8) * 8)
    hw_pad = ((hw + tile_hw - 1) // tile_hw) * tile_hw

    x_nhwc = jnp.transpose(x_nchw, (0, 2, 3, 1)).astype(jnp.float32)
    xpad = jnp.pad(x_nhwc, ((0, 0), (1, 1), (1, 1), (0, 0)))   # (N, H+2, W+2, Cin)
    # full im2col with the 9 taps packed into the contraction/lane dim: K = 9*Cin
    # patches[n, r*W+c, (di*3+dj)*Cin + ci] == xpad[n, r+di, c+dj, ci]
    patches = jnp.concatenate(
        [xpad[:, di:di + h, dj:dj + w, :] for di in range(3) for dj in range(3)],
        axis=-1).reshape(n, hw, 9 * cin)
    patches = jnp.pad(patches,
                      ((0, 0), (0, hw_pad - hw), (0, 0))).astype(jnp.bfloat16)

    # conv weights as (9*Cin, Cout_pad): wc[(di*3+dj)*Cin + ci, co] = conv_w[co,ci,di,dj]
    wc = jnp.transpose(params["conv_w"], (2, 3, 1, 0)).reshape(9 * cin, cout)
    wc = jnp.pad(wc, ((0, 0), (0, LANE - cout))).astype(jnp.bfloat16)
    bc = jnp.pad(params["conv_b"].reshape(1, cout).astype(jnp.float32),
                 ((0, 0), (0, LANE - cout)))

    # pooling row built ONCE here (hoisted loop-invariant constant); 1/hw applied in f32
    pool = jnp.concatenate([jnp.ones((1, hw), jnp.float32),
                            jnp.zeros((1, hw_pad - hw), jnp.float32)],
                           axis=1).astype(jnp.bfloat16)

    wfc = jnp.pad(params["fc_w"].T,
                  ((0, LANE - cout), (0, LANE - num_out))).astype(jnp.bfloat16)
    bfc = jnp.pad(params["fc_b"].reshape(1, num_out).astype(jnp.float32),
                  ((0, 0), (0, LANE - num_out)))

    args = (patches, wc, bc, pool, wfc, bfc)
    dims = dict(hw_pad=hw_pad, tile_hw=tile_hw, inv_hw=1.0 / hw)
    return args, dims, n, num_out, cin


def _in_specs(hw_pad, k):
    return [
        pl.BlockSpec((1, hw_pad, k), lambda b: (b, 0, 0)),   # patches: per-batch slab
        pl.BlockSpec((k, LANE), lambda b: (0, 0)),           # conv W (fetched once)
        pl.BlockSpec((1, LANE), lambda b: (0, 0)),           # conv b
        pl.BlockSpec((1, hw_pad), lambda b: (0, 0)),         # pool row
        pl.BlockSpec((LANE, LANE), lambda b: (0, 0)),        # fc W
        pl.BlockSpec((1, LANE), lambda b: (0, 0)),           # fc b
    ]


def _cost_estimate(n, hw_pad, k, args, out_elems):
    flops = n * (2 * hw_pad * k * LANE + 2 * hw_pad * LANE) + 2 * n * LANE * LANE
    bytes_accessed = int(sum(a.size * a.dtype.itemsize for a in args)) + out_elems * 4
    return pl.CostEstimate(flops=flops, transcendentals=0,
                           bytes_accessed=bytes_accessed)


# ------------------------------ forward wrapper ------------------------------

@functools.partial(jax.jit, static_argnames=("training",))
def baseline_forward(x_nchw, params, targets=None, training=False):
    args, dims, n, num_out, cin = _prepare_inputs(x_nchw, params)
    k = 9 * cin
    specs = _in_specs(dims["hw_pad"], k)
    scratch = [pltpu.VMEM((n, LANE), jnp.float32)]           # pooled rows, batched head
    cparams = pltpu.CompilerParams(dimension_semantics=("arbitrary",))

    if not training:
        pred_pad = pl.pallas_call(
            functools.partial(_eval_kernel, **dims),
            grid=(n,),
            out_shape=jax.ShapeDtypeStruct((n, LANE), jnp.float32),
            in_specs=specs,
            out_specs=pl.BlockSpec((n, LANE), lambda b: (0, 0)),
            scratch_shapes=scratch,
            compiler_params=cparams,
            cost_estimate=_cost_estimate(n, dims["hw_pad"], k, args, n * LANE),
        )(*args)
        return pred_pad[:, :num_out]                          # (N, num_out)

    tgt = jnp.pad(targets.astype(jnp.float32),
                  ((0, 0), (0, LANE - num_out)))              # (N, 128)
    loss = pl.pallas_call(
        functools.partial(_train_kernel, n=n, num_out=num_out, **dims),
        grid=(n,),
        out_shape=jax.ShapeDtypeStruct((1, 1), jnp.float32),
        in_specs=specs + [pl.BlockSpec((n, LANE), lambda b: (0, 0))],
        out_specs=pl.BlockSpec((1, 1), lambda b: (0, 0)),
        scratch_shapes=scratch,
        compiler_params=cparams,
        cost_estimate=_cost_estimate(n, dims["hw_pad"], k, args + (tgt,), 1),
    )(*args, tgt)
    # TODO(synk): SummaryWriter.add_scalar loss logging and the self.step counter
    # have no Pallas equivalent.
    return loss.reshape(1)                                    # torch.unsqueeze(loss, 0)


# ---------------------------------- main ----------------------------------

if __name__ == "__main__":
    key = jax.random.PRNGKey(0)
    kx, kt, kp = jax.random.split(key, 3)

    N, CIN, H, W = 2, 4, 16, 16
    COUT, NUM_OUT = 8, 5

    x = jax.random.normal(kx, (N, CIN, H, W), jnp.float32)    # NCHW input
    targets = jax.random.uniform(kt, (N, NUM_OUT), jnp.float32)
    params = init_params(kp, cin=CIN, cout=COUT, num_out=NUM_OUT)

    # eval path: returns predictions
    pred = baseline_forward(x, params, training=False)
    jax.block_until_ready(pred)
    assert pred.shape == (N, NUM_OUT)

    # training path: returns loss of shape (1,)
    loss = baseline_forward(x, params, targets=targets, training=True)
    jax.block_until_ready(loss)
    assert loss.shape == (1,)

    print("KERNEL_OK")
</pallas_src>

<mosaic_0001>
module attributes {stable_mosaic.version = 11 : i64} {
  func.func @_eval_kernel(%arg0: i32, %arg1: memref<1x256x36xbf16, #tpu.memory_space<vmem>>, %arg2: memref<36x128xbf16, #tpu.memory_space<vmem>>, %arg3: memref<1x128xf32, #tpu.memory_space<vmem>>, %arg4: memref<1x256xbf16, #tpu.memory_space<vmem>>, %arg5: memref<128x128xbf16, #tpu.memory_space<vmem>>, %arg6: memref<1x128xf32, #tpu.memory_space<vmem>>, %arg7: memref<2x128xf32, #tpu.memory_space<vmem>>, %arg8: memref<2x128xf32, #tpu.memory_space<vmem>>) attributes {dimension_semantics = [#tpu.dimension_semantics<arbitrary>], iteration_bounds = array<i64: 2>, scalar_prefetch = 0 : i64, scratch_operands = 1 : i64, tpu.core_type = #tpu.core_type<tc>, window_params = [{transform_indices = @transform_0, window_bounds = array<i64: 1, 256, 36>}, {pipeline_mode = #tpu.pipeline_mode<synchronous>, transform_indices = @transform_1, window_bounds = array<i64: 36, 128>}, {pipeline_mode = #tpu.pipeline_mode<synchronous>, transform_indices = @transform_2, window_bounds = array<i64: 1, 128>}, {pipeline_mode = #tpu.pipeline_mode<synchronous>, transform_indices = @transform_3, window_bounds = array<i64: 1, 256>}, {pipeline_mode = #tpu.pipeline_mode<synchronous>, transform_indices = @transform_4, window_bounds = array<i64: 128, 128>}, {pipeline_mode = #tpu.pipeline_mode<synchronous>, transform_indices = @transform_5, window_bounds = array<i64: 1, 128>}, {pipeline_mode = #tpu.pipeline_mode<synchronous>, transform_indices = @transform_6, window_bounds = array<i64: 2, 128>}]} {
    %cst = arith.constant 0.000000e+00 : f32
    %0 = vector.broadcast %cst : f32 to vector<1x128xf32>
    %c0 = arith.constant 0 : index
    %c0_0 = arith.constant 0 : index
    %c0_1 = arith.constant 0 : index
    %1 = vector.load %arg1[%c0, %c0_0, %c0_1] : memref<1x256x36xbf16, #tpu.memory_space<vmem>>, vector<1x256x36xbf16>
    %2 = vector.shape_cast %1 : vector<1x256x36xbf16> to vector<256x36xbf16>
    %c0_2 = arith.constant 0 : index
    %c0_3 = arith.constant 0 : index
    %3 = vector.load %arg2[%c0_2, %c0_3] : memref<36x128xbf16, #tpu.memory_space<vmem>>, vector<36x128xbf16>
    %cst_4 = arith.constant dense<0.000000e+00> : vector<256x128xf32>
    %4 = tpu.matmul %2, %3, %cst_4 {dimension_numbers = #tpu.dot_dimension_numbers<[1], [0], [0], [1], [0, 0, 1, 1], [], []>} : vector<256x36xbf16>, vector<36x128xbf16>, vector<256x128xf32> -> vector<256x128xf32>
    %c0_5 = arith.constant 0 : index
    %c0_6 = arith.constant 0 : index
    %5 = vector.load %arg3[%c0_5, %c0_6] : memref<1x128xf32, #tpu.memory_space<vmem>>, vector<1x128xf32>
    %6 = vector.broadcast %5 : vector<1x128xf32> to vector<256x128xf32>
    %7 = arith.addf %4, %6 : vector<256x128xf32>
    %cst_7 = arith.constant 0.000000e+00 : f32
    %8 = vector.broadcast %cst_7 : f32 to vector<256x128xf32>
    %9 = arith.maximumf %7, %8 : vector<256x128xf32>
    %c0_8 = arith.constant 0 : index
    %c0_9 = arith.constant 0 : index
    %10 = vector.load %arg4[%c0_8, %c0_9] : memref<1x256xbf16, #tpu.memory_space<vmem>>, vector<1x256xbf16>
    %11 = arith.truncf %9 : vector<256x128xf32> to vector<256x128xbf16>
    %cst_10 = arith.constant dense<0.000000e+00> : vector<1x128xf32>
    %12 = tpu.matmul %10, %11, %cst_10 {dimension_numbers = #tpu.dot_dimension_numbers<[1], [0], [0], [1], [0, 0, 1, 1], [], []>} : vector<1x256xbf16>, vector<256x128xbf16>, vector<1x128xf32> -> vector<1x128xf32>
    %13 = arith.addf %0, %12 : vector<1x128xf32>
    %cst_11 = arith.constant 3.906250e-03 : f32
    %14 = vector.broadcast %cst_11 : f32 to vector<1x128xf32>
    %15 = arith.mulf %13, %14 : vector<1x128xf32>
    %16 = arith.index_cast %arg0 : i32 to index
    %c0_12 = arith.constant 0 : index
    %17 = vector.load %arg8[%16, %c0_12] : memref<2x128xf32, #tpu.memory_space<vmem>>, vector<1x128xf32>
    tpu.vector_store %arg8[%16, %c0_12], %15 {strides = array<i32>} : memref<2x128xf32, #tpu.memory_space<vmem>>, vector<1x128xf32>,
    %c1_i32 = arith.constant 1 : i32
    %18 = arith.cmpi eq, %arg0, %c1_i32 : i32
    %19 = arith.extui %18 : i1 to i32
    %c0_i32 = arith.constant 0 : i32
    %20 = arith.cmpi ne, %19, %c0_i32 : i32
    scf.if %20 {
      %c0_13 = arith.constant 0 : index
      %c0_14 = arith.constant 0 : index
      %21 = vector.load %arg8[%c0_13, %c0_14] : memref<2x128xf32, #tpu.memory_space<vmem>>, vector<2x128xf32>
      %22 = arith.truncf %21 : vector<2x128xf32> to vector<2x128xbf16>
      %c0_15 = arith.constant 0 : index
      %c0_16 = arith.constant 0 : index
      %23 = vector.load %arg5[%c0_15, %c0_16] : memref<128x128xbf16, #tpu.memory_space<vmem>>, vector<128x128xbf16>
      %cst_17 = arith.constant dense<0.000000e+00> : vector<2x128xf32>
      %24 = tpu.matmul %22, %23, %cst_17 {dimension_numbers = #tpu.dot_dimension_numbers<[1], [0], [0], [1], [0, 0, 1, 1], [], []>} : vector<2x128xbf16>, vector<128x128xbf16>, vector<2x128xf32> -> vector<2x128xf32>
      %c0_18 = arith.constant 0 : index
      %c0_19 = arith.constant 0 : index
      %25 = vector.load %arg6[%c0_18, %c0_19] : memref<1x128xf32, #tpu.memory_space<vmem>>, vector<1x128xf32>
      %26 = vector.broadcast %25 : vector<1x128xf32> to vector<2x128xf32>
      %27 = arith.addf %24, %26 : vector<2x128xf32>
      %c0_20 = arith.constant 0 : index
      %c0_21 = arith.constant 0 : index
      %28 = vector.load %arg7[%c0_20, %c0_21] : memref<2x128xf32, #tpu.memory_space<vmem>>, vector<2x128xf32>
      tpu.vector_store %arg7[%c0_20, %c0_21], %27 {strides = array<i32>} : memref<2x128xf32, #tpu.memory_space<vmem>>, vector<2x128xf32>,
    } else {
    }
    return
  }
  func.func @transform_0(%arg0: i32) -> (i32, i32, i32) {
    %c0_i32 = arith.constant 0 : i32
    %c0_i32_0 = arith.constant 0 : i32
    %c0_i32_1 = arith.constant 0 : i32
    return %arg0, %c0_i32, %c0_i32_0 : i32, i32, i32
  }
  func.func @transform_1(%arg0: i32) -> (i32, i32) {
    %c0_i32 = arith.constant 0 : i32
    %c0_i32_0 = arith.constant 0 : i32
    %c0_i32_1 = arith.constant 0 : i32
    return %c0_i32, %c0_i32_0 : i32, i32
  }
  func.func @transform_2(%arg0: i32) -> (i32, i32) {
    %c0_i32 = arith.constant 0 : i32
    %c0_i32_0 = arith.constant 0 : i32
    %c0_i32_1 = arith.constant 0 : i32
    return %c0_i32, %c0_i32_0 : i32, i32
  }
  func.func @transform_3(%arg0: i32) -> (i32, i32) {
    %c0_i32 = arith.constant 0 : i32
    %c0_i32_0 = arith.constant 0 : i32
    %c0_i32_1 = arith.constant 0 : i32
    return %c0_i32, %c0_i32_0 : i32, i32
  }
  func.func @transform_4(%arg0: i32) -> (i32, i32) {
    %c0_i32 = arith.constant 0 : i32
    %c0_i32_0 = arith.constant 0 : i32
    %c0_i32_1 = arith.constant 0 : i32
    return %c0_i32, %c0_i32_0 : i32, i32
  }
  func.func @transform_5(%arg0: i32) -> (i32, i32) {
    %c0_i32 = arith.constant 0 : i32
    %c0_i32_0 = arith.constant 0 : i32
    %c0_i32_1 = arith.constant 0 : i32
    return %c0_i32, %c0_i32_0 : i32, i32
  }
  func.func @transform_6(%arg0: i32) -> (i32, i32) {
    %c0_i32 = arith.constant 0 : i32
    %c0_i32_0 = arith.constant 0 : i32
    %c0_i32_1 = arith.constant 0 : i32
    return %c0_i32, %c0_i32_0 : i32, i32
  }
}

</mosaic_0001>

<llo_original>
// kernel: baseline_forward.1
$region0: #{baseline_forward.1}
  #allocation0 [shape = 'u32[]', space=smem, size = 0x4, offset = 0x4, fixed_abs, tag = 'smem constant byte address 0x4 - core index']
  #allocation1 [shape = 'u32[144,128]{1,0:T(1,128)}', space=vmem, size = 0x12000, scoped, tag = 'internal scratch']
  #allocation2 [shape = 'f32[2,128]{1,0:T(2,128)}', space=vmem, size = 0x400, scoped, tag = 'scratch operand']
  %s0 = inlined_call_operand.vmem [shape: bf16[2,256,36], index: 0, kind: input, shape index: {}]
  %s1 = inlined_call_operand.vmem [shape: bf16[36,128], index: 1, kind: input, shape index: {}]
  %s2 = inlined_call_operand.vmem [shape: f32[1,128], index: 2, kind: input, shape index: {}]
  %s3 = inlined_call_operand.vmem [shape: bf16[1,256], index: 3, kind: input, shape index: {}]
  %s4 = inlined_call_operand.vmem [shape: bf16[128,128], index: 4, kind: input, shape index: {}]
  %s5 = inlined_call_operand.vmem [shape: f32[1,128], index: 5, kind: input, shape index: {}]
  %s6 = inlined_call_operand.hbm [shape: f32[2,128], index: 6, kind: output, shape index: {}]
  %s7 = sld [smem:[#allocation0]]
  $region61: #{baseline_forward.1} parent=0
    _
  %s9 = ssub.s32 1, %s7
  %s10 = scalar_select 0, %s9, %s7
  $region1: #{baseline_forward.1} parent=0
    #allocation3 [shape = 'u8[1024]{0}', space=vmem, size = 0x400, scoped, tag = 'output window, operand 0, single buffered']
    #allocation4 [shape = 's32[2]{0}', space=sflag, size = 0x8, scoped, tag = 'scoped memory for baseline_forward.1']
    %11 = vsyncpa [#allocation4], 0
    loop: start=0, step=1, limit=4
    $region2: #{baseline_forward.1} parent=1 // loop_pre_header
      _
    $region3: #{baseline_forward.1} parent=1 // loop_header
      %s13 = sphi 0, %s17
      %p14 = scmp.ge.s32.totalorder %s13, 4
      %s23 = sphi 0, %s25
      %s26 = sphi 0, %s23
      %s27 = sphi 0, %s26
      %s43 = sphi 0, %s27
      %s47 = sphi 0, %s47
      %s49 = sphi 0, %s47
      %s50 = sphi 0, %s49
      %s64 = sphi 0, %s50
      %s68 = sphi 0, %s68
      %s70 = sphi 0, %s68
      %s71 = sphi 0, %s70
      %s85 = sphi 0, %s71
      %s89 = sphi 0, %s89
      %s91 = sphi 0, %s89
      %s92 = sphi 0, %s91
      %s106 = sphi 0, %s92
      %s110 = sphi 0, %s110
      %s112 = sphi 0, %s110
      %s113 = sphi 0, %s112
      %s127 = sphi 0, %s113
      %s131 = sphi 0, %s131
      %s133 = sphi 0, %s131
      %s134 = sphi 0, %s133
      %s148 = sphi 0, %s134
      %s152 = sphi 0, %s152
      %s154 = sphi 0, %s152
      %s155 = sphi 0, %s154
      %s169 = sphi 0, %s155
    $region4: #{baseline_forward.1} parent=1 // loop_header_branch
      %16 = sbr.rel (%p14) target = $region8
    $region5: #{baseline_forward.1} parent=1 // loop_body
      %s18 = ssub.s32 %s13, 1
      %s19 = ssub.s32 %s13, 2
      %s20 = sadd.s32 %s13, 1
      %s21 = ssub.s32 %s13, %s20
      %p22 = scmp.eq.s32.totalorder %s21, 0
      %s24 = sadd.s32 %s23, 1
      %s25 = scalar_select %p22, %s23, %s24
      %p28 = pneg %p22
      %p29 = scmp.eq.s32.totalorder %s13, 1
      %p30 = por %p28, %p29
      %p31 = scmp.ne.s32.totalorder %s23, %s26
      %p32 = scmp.eq.s32.totalorder %s13, 0
      %p33 = por %p31, %p32
      %p34 = scmp.ne.s32.totalorder %s23, %s26
      %p35 = scmp.eq.s32.totalorder %s18, 1
      %p36 = por %p34, %p35
      %p37 = scmp.ne.s32.totalorder %s26, %s27
      %p38 = scmp.eq.s32.totalorder %s18, 0
      %p39 = por %p37, %p38
      %p40 = scmp.ne.s32.totalorder %s26, %s27
      %p41 = scmp.eq.s32.totalorder %s19, 1
      %p42 = por %p40, %p41
      %p44 = scmp.ne.s32.totalorder %s27, %s43
      %p45 = scmp.eq.s32.totalorder %s19, 0
      %p46 = por %p44, %p45
      %s48 = sadd.s32 %s47, 1
      %p51 = scmp.eq.s32.totalorder %s13, 1
      %p52 = scmp.ne.s32.totalorder %s47, %s49
      %p53 = scmp.eq.s32.totalorder %s13, 0
      %p54 = por %p52, %p53
      %p55 = scmp.ne.s32.totalorder %s47, %s49
      %p56 = scmp.eq.s32.totalorder %s18, 1
      %p57 = por %p55, %p56
      %p58 = scmp.ne.s32.totalorder %s49, %s50
      %p59 = scmp.eq.s32.totalorder %s18, 0
      %p60 = por %p58, %p59
      %p61 = scmp.ne.s32.totalorder %s49, %s50
      %p62 = scmp.eq.s32.totalorder %s19, 1
      %p63 = por %p61, %p62
      %p65 = scmp.ne.s32.totalorder %s50, %s64
      %p66 = scmp.eq.s32.totalorder %s19, 0
      %p67 = por %p65, %p66
      %s69 = sadd.s32 %s68, 1
      %p72 = scmp.eq.s32.totalorder %s13, 1
      %p73 = scmp.ne.s32.totalorder %s68, %s70
      %p74 = scmp.eq.s32.totalorder %s13, 0
      %p75 = por %p73, %p74
      %p76 = scmp.ne.s32.totalorder %s68, %s70
      %p77 = scmp.eq.s32.totalorder %s18, 1
      %p78 = por %p76, %p77
      %p79 = scmp.ne.s32.totalorder %s70, %s71
      %p80 = scmp.eq.s32.totalorder %s18, 0
      %p81 = por %p79, %p80
      %p82 = scmp.ne.s32.totalorder %s70, %s71
      %p83 = scmp.eq.s32.totalorder %s19, 1
      %p84 = por %p82, %p83
      %p86 = scmp.ne.s32.totalorder %s71, %s85
      %p87 = scmp.eq.s32.totalorder %s19, 0
      %p88 = por %p86, %p87
      %s90 = sadd.s32 %s89, 1
      %p93 = scmp.eq.s32.totalorder %s13, 1
      %p94 = scmp.ne.s32.totalorder %s89, %s91
      %p95 = scmp.eq.s32.totalorder %s13, 0
      %p96 = por %p94, %p95
      %p97 = scmp.ne.s32.totalorder %s89, %s91
      %p98 = scmp.eq.s32.totalorder %s18, 1
      %p99 = por %p97, %p98
      %p100 = scmp.ne.s32.totalorder %s91, %s92
      %p101 = scmp.eq.s32.totalorder %s18, 0
      %p102 = por %p100, %p101
      %p103 = scmp.ne.s32.totalorder %s91, %s92
      %p104 = scmp.eq.s32.totalorder %s19, 1
      %p105 = por %p103, %p104
      %p107 = scmp.ne.s32.totalorder %s92, %s106
      %p108 = scmp.eq.s32.totalorder %s19, 0
      %p109 = por %p107, %p108
      %s111 = sadd.s32 %s110, 1
      %p114 = scmp.eq.s32.totalorder %s13, 1
      %p115 = scmp.ne.s32.totalorder %s110, %s112
      %p116 = scmp.eq.s32.totalorder %s13, 0
      %p117 = por %p115, %p116
      %p118 = scmp.ne.s32.totalorder %s110, %s112
      %p119 = scmp.eq.s32.totalorder %s18, 1
      %p120 = por %p118, %p119
      %p121 = scmp.ne.s32.totalorder %s112, %s113
      %p122 = scmp.eq.s32.totalorder %s18, 0
      %p123 = por %p121, %p122
      %p124 = scmp.ne.s32.totalorder %s112, %s113
      %p125 = scmp.eq.s32.totalorder %s19, 1
      %p126 = por %p124, %p125
      %p128 = scmp.ne.s32.totalorder %s113, %s127
      %p129 = scmp.eq.s32.totalorder %s19, 0
      %p130 = por %p128, %p129
      %s132 = sadd.s32 %s131, 1
      %p135 = scmp.eq.s32.totalorder %s13, 1
      %p136 = scmp.ne.s32.totalorder %s131, %s133
      %p137 = scmp.eq.s32.totalorder %s13, 0
      %p138 = por %p136, %p137
      %p139 = scmp.ne.s32.totalorder %s131, %s133
      %p140 = scmp.eq.s32.totalorder %s18, 1
      %p141 = por %p139, %p140
      %p142 = scmp.ne.s32.totalorder %s133, %s134
      %p143 = scmp.eq.s32.totalorder %s18, 0
      %p144 = por %p142, %p143
      %p145 = scmp.ne.s32.totalorder %s133, %s134
      %p146 = scmp.eq.s32.totalorder %s19, 1
      %p147 = por %p145, %p146
      %p149 = scmp.ne.s32.totalorder %s134, %s148
      %p150 = scmp.eq.s32.totalorder %s19, 0
      %p151 = por %p149, %p150
      %s153 = sadd.s32 %s152, 1
      %p156 = scmp.eq.s32.totalorder %s13, 1
      %p157 = scmp.ne.s32.totalorder %s152, %s154
      %p158 = scmp.eq.s32.totalorder %s13, 0
      %p159 = por %p157, %p158
      %p160 = scmp.ne.s32.totalorder %s152, %s154
      %p161 = scmp.eq.s32.totalorder %s18, 1
      %p162 = por %p160, %p161
      %p163 = scmp.ne.s32.totalorder %s154, %s155
      %p164 = scmp.eq.s32.totalorder %s18, 0
      %p165 = por %p163, %p164
      %p166 = scmp.ne.s32.totalorder %s154, %s155
      %p167 = scmp.eq.s32.totalorder %s19, 1
      %p168 = por %p166, %p167
      %p170 = scmp.ne.s32.totalorder %s155, %s169
      %p171 = scmp.eq.s32.totalorder %s19, 0
      %p172 = por %p170, %p171
      %p173 = scmp.le.s32.totalorder 1, %s13
      %p174 = scmp.lt.s32.totalorder %s13, 3
      %p175 = pnand %p173, %p174
      %p176 = pneg %p175
      // Predicated region
      $region9: #{baseline_forward.1} parent=5 // pred_check
        _
      $region10: #{baseline_forward.1} parent=5 // pred_check_branch
        %178 = sbr.rel (%p175) target = $region12
      $region11: #{baseline_forward.1} parent=5 // pred_region
        %s179 = ssub.s32 %s13, 1
        // Predicated region
        $region13: #{baseline_forward.1} parent=11 // pred_check
          %p180 = pneg %p60
        $region14: #{baseline_forward.1} parent=11 // pred_check_branch
          %182 = sbr.rel (%p180) target = $region16
        $region15: #{baseline_forward.1} parent=11 // pred_region
          _
        $region16: #{baseline_forward.1} parent=11 // pred_fallthru
          _
        // Predicated region
        $region17: #{baseline_forward.1} parent=11 // pred_check
          %p183 = pneg %p81
        $region18: #{baseline_forward.1} parent=11 // pred_check_branch
          %185 = sbr.rel (%p183) target = $region20
        $region19: #{baseline_forward.1} parent=11 // pred_region
          _
        $region20: #{baseline_forward.1} parent=11 // pred_fallthru
          _
        // Predicated region
        $region21: #{baseline_forward.1} parent=11 // pred_check
          %p186 = pneg %p102
        $region22: #{baseline_forward.1} parent=11 // pred_check_branch
          %188 = sbr.rel (%p186) target = $region24
        $region23: #{baseline_forward.1} parent=11 // pred_region
          _
        $region24: #{baseline_forward.1} parent=11 // pred_fallthru
          _
        // Predicated region
        $region25: #{baseline_forward.1} parent=11 // pred_check
          %p189 = pneg %p123
        $region26: #{baseline_forward.1} parent=11 // pred_check_branch
          %191 = sbr.rel (%p189) target = $region28
        $region27: #{baseline_forward.1} parent=11 // pred_region
          _
        $region28: #{baseline_forward.1} parent=11 // pred_fallthru
          _
        // Predicated region
        $region29: #{baseline_forward.1} parent=11 // pred_check
          %p192 = pneg %p144
        $region30: #{baseline_forward.1} parent=11 // pred_check_branch
          %194 = sbr.rel (%p192) target = $region32
        $region31: #{baseline_forward.1} parent=11 // pred_region
          _
        $region32: #{baseline_forward.1} parent=11 // pred_fallthru
          _
      $region12: #{baseline_forward.1} parent=5 // pred_fallthru
        _
      %p195 = scmp.lt.s32.totalorder %s13, 2
      // Predicated region
      $region33: #{baseline_forward.1} parent=5 // pred_check
        %p196 = pneg %p195
      $region34: #{baseline_forward.1} parent=5 // pred_check_branch
        %198 = sbr.rel (%p196) target = $region36
      $region35: #{baseline_forward.1} parent=5 // pred_region
        // Predicated region
        $region37: #{baseline_forward.1} parent=35 // pred_check
          %p199 = pneg %p33
        $region38: #{baseline_forward.1} parent=35 // pred_check_branch
          %201 = sbr.rel (%p199) target = $region40
        $region39: #{baseline_forward.1} parent=35 // pred_region
          %p202 = scmp.lt.s32.totalorder %s13, 1
          %s203 = scalar_select %p202, %s13, 1
          %s204 = smul.addr %s203, 32
          %s205 = smul.addr %s204, 4
          %s206 = scalar_lea.vmem %s0, %s205
        $region40: #{baseline_forward.1} parent=35 // pred_fallthru
          _
      $region36: #{baseline_forward.1} parent=5 // pred_fallthru
        _
      %p207 = scmp.le.s32.totalorder 1, %s13
      %p208 = scmp.lt.s32.totalorder %s13, 3
      %p209 = pnand %p207, %p208
      %p210 = pneg %p209
      // Predicated region
      $region41: #{baseline_forward.1} parent=5 // pred_check
        _
      $region42: #{baseline_forward.1} parent=5 // pred_check_branch
        %212 = sbr.rel (%p209) target = $region44
      $region43: #{baseline_forward.1} parent=5 // pred_region
        %s213 = ssub.s32 %s13, 1
        %p214 = scmp.lt.s32.totalorder %s18, 1
        %s215 = scalar_select %p214, %s18, 1
        %s216 = smul.addr %s215, 32
        %s217 = smul.addr %s216, 4
        %s218 = scalar_lea.vmem %s0, %s217
        %p219 = pneg %p39
        %p220 = pneg %p36
        %p221 = pneg %p60
        %p222 = pneg %p57
        %p223 = pneg %p81
        %p224 = pneg %p78
        %p225 = pneg %p102
        %p226 = pneg %p99
        %p227 = pneg %p123
        %p228 = pneg %p120
        %p229 = pneg %p144
        %p230 = pneg %p141
        %p231 = pneg %p165
        %p232 = pneg %p162
        %p233 = scmp.lt.s32.totalorder %s18, 1
        %s234 = scalar_select %p233, %s18, 1
        %s235 = smul.addr %s234, 32
        %s236 = smul.addr %s235, 4
        %s237 = scalar_lea.vmem %s0, %s236
        %v239 = vld [vmem:[%s237] sm:$0xf]
        %v240 = vld [vmem:[%s237 + $0x4] sm:$0xf]
        %v241 = vld [vmem:[%s237 + $0x8] sm:$0xf]
        %v242 = vld [vmem:[%s237 + $0xc] sm:$0xf]
        %v243 = vld [vmem:[%s237 + $0x10] sm:$0xf]
        %v244 = vld [vmem:[%s237 + $0x14] sm:$0xf]
        %v245 = vld [vmem:[%s237 + $0x18] sm:$0xf]
        %v246 = vld [vmem:[%s237 + $0x1c] sm:$0xf]
        %v247 = vld [vmem:[%s237 + $0x20] sm:$0xf]
        %v248 = vld [vmem:[%s237 + $0x24] sm:$0xf]
        %v249 = vld [vmem:[%s237 + $0x28] sm:$0xf]
        %v250 = vld [vmem:[%s237 + $0x2c] sm:$0xf]
        %v251 = vld [vmem:[%s237 + $0x30] sm:$0xf]
        %v252 = vld [vmem:[%s237 + $0x34] sm:$0xf]
        %v253 = vld [vmem:[%s237 + $0x38] sm:$0xf]
        %v254 = vld [vmem:[%s237 + $0x3c] sm:$0xf]
        %v255 = vld [vmem:[%s237 + $0x40] sm:$0xf]
        %v256 = vld [vmem:[%s237 + $0x44] sm:$0xf]
        %v257 = vld [vmem:[%s237 + $0x48] sm:$0xf]
        %v258 = vld [vmem:[%s237 + $0x4c] sm:$0xf]
        %v259 = vld [vmem:[%s237 + $0x50] sm:$0xf]
        %v260 = vld [vmem:[%s237 + $0x54] sm:$0xf]
        %v261 = vld [vmem:[%s237 + $0x58] sm:$0xf]
        %v262 = vld [vmem:[%s237 + $0x5c] sm:$0xf]
        %v263 = vld [vmem:[%s237 + $0x60] sm:$0xf]
        %v264 = vld [vmem:[%s237 + $0x64] sm:$0xf]
        %v265 = vld [vmem:[%s237 + $0x68] sm:$0xf]
        %v266 = vld [vmem:[%s237 + $0x6c] sm:$0xf]
        %v267 = vld [vmem:[%s237 + $0x70] sm:$0xf]
        %v268 = vld [vmem:[%s237 + $0x74] sm:$0xf]
        %v269 = vld [vmem:[%s237 + $0x78] sm:$0xf]
        %v270 = vld [vmem:[%s237 + $0x7c] sm:$0xf]
        %v271 = vld [vmem:[%s1] sm:$0xf]
        %v272 = vld [vmem:[%s1 + $0x4] sm:$0xf]
        %v273 = vld [vmem:[%s1 + $0x8] sm:$0xf]
        %v274 = vld [vmem:[%s1 + $0xc] sm:$0xf]
        %v275 = vld [vmem:[%s1 + $0x10] sm:$0x3]
        %v276 = vld [vmem:[%s2] sm:$0x1]
        %v278 = vlaneseq
        %v279 = vshrl.u32 %v278, 7
        %v280 = vsub.s32 0, %v279
        %v281 = vrot.slane %v276, %v280
        %v315 = vunpack.c.l.b16 %v239
        %v316 = vunpack.c.l.b16 %v240
        %v317 = vunpack.c.l.b16 %v241
        %v318 = vunpack.c.l.b16 %v242
        %v319 = vunpack.c.l.b16 %v243
        %v320 = vunpack.c.l.b16 %v244
        %v321 = vunpack.c.l.b16 %v245
        %v322 = vunpack.c.l.b16 %v246
        %v323 = vunpack.c.l.b16 %v247
        %v324 = vunpack.c.l.b16 %v248
        %v325 = vunpack.c.l.b16 %v249
        %v326 = vunpack.c.l.b16 %v250
        %v327 = vunpack.c.l.b16 %v251
        %v328 = vunpack.c.l.b16 %v252
        %v329 = vunpack.c.l.b16 %v253
        %v330 = vunpack.c.l.b16 %v254
        %v331 = vunpack.c.l.b16 %v255
        %v332 = vunpack.c.l.b16 %v256
        %v333 = vunpack.c.l.b16 %v257
        %v334 = vunpack.c.l.b16 %v258
        %v335 = vunpack.c.l.b16 %v259
        %v336 = vunpack.c.l.b16 %v260
        %v337 = vunpack.c.l.b16 %v261
        %v338 = vunpack.c.l.b16 %v262
        %v339 = vunpack.c.l.b16 %v263
        %v340 = vunpack.c.l.b16 %v264
        %v341 = vunpack.c.l.b16 %v265
        %v342 = vunpack.c.l.b16 %v266
        %v343 = vunpack.c.l.b16 %v267
        %v344 = vunpack.c.l.b16 %v268
        %v345 = vunpack.c.l.b16 %v269
        %v346 = vunpack.c.l.b16 %v270
        %v347 = vpack.c.b16 %v316, %v315
        %v348 = vpack.c.b16 %v318, %v317
        %v349 = vpack.c.b16 %v320, %v319
        %v350 = vpack.c.b16 %v322, %v321
        %v351 = vpack.c.b16 %v324, %v323
        %v352 = vpack.c.b16 %v326, %v325
        %v353 = vpack.c.b16 %v328, %v327
        %v354 = vpack.c.b16 %v330, %v329
        %v355 = vpack.c.b16 %v332, %v331
        %v356 = vpack.c.b16 %v334, %v333
        %v357 = vpack.c.b16 %v336, %v335
        %v358 = vpack.c.b16 %v338, %v337
        %v359 = vpack.c.b16 %v340, %v339
        %v360 = vpack.c.b16 %v342, %v341
        %v361 = vpack.c.b16 %v344, %v343
        %v362 = vpack.c.b16 %v346, %v345
        %v368 = vunpack.c.l.b16 %v271
        %v369 = vunpack.c.l.b16 %v272
        %v370 = vunpack.c.l.b16 %v273
        %v371 = vunpack.c.l.b16 %v274
        %v372 = vunpack.c.l.b16 %v275
        %v373 = vpack.c.b16 %v369, %v368
        %v374 = vpack.c.b16 %v371, %v370
        %v375 = vpack.c.b16 %v372, %v372
        %vm378 = vcmask 293888
        %v380 = vsel %vm378, %v347, 0
        %v383 = vsel %vm378, %v348, 0
        %v386 = vsel %vm378, %v349, 0
        %v389 = vsel %vm378, %v350, 0
        %v392 = vsel %vm378, %v351, 0
        %v395 = vsel %vm378, %v352, 0
        %v398 = vsel %vm378, %v353, 0
        %v401 = vsel %vm378, %v354, 0
        %v404 = vsel %vm378, %v355, 0
        %v407 = vsel %vm378, %v356, 0
        %v410 = vsel %vm378, %v357, 0
        %v413 = vsel %vm378, %v358, 0
        %v416 = vsel %vm378, %v359, 0
        %v419 = vsel %vm378, %v360, 0
        %v422 = vsel %vm378, %v361, 0
        %v425 = vsel %vm378, %v362, 0
        %vm427 = vcmask 1041408
        %v429 = vsel %vm427, %v375, 0
        %431 = vmatprep.subr.bf16.mxu0 0
        %432 = vmatpush1.bf16.msra.mxu0 0
        %433 = vmatprep.subr.bf16.mxu0 0
        %434 = vmatpush1.bf16.msra.mxu0 0
        %435 = vmatprep.subr.bf16.mxu0 0
        %436 = vmatpush1.bf16.msra.mxu0 0
        %437 = vmatprep.subr.bf16.mxu0 0
        %438 = vmatpush1.bf16.msra.mxu0 0
        %439 = vmatprep.subr.bf16.mxu0 0
        %440 = vmatpush1.bf16.msra.mxu0 0
        %441 = vmatprep.subr.bf16.mxu0 0
        %442 = vmatpush1.bf16.msra.mxu0 %v429
        %443 = vmatprep.subr.bf16.mxu0 0
        %444 = vmatpush1.bf16.msra.mxu0 %v374
        %445 = vmatprep.subr.bf16.mxu0 0
        %446 = vmatpush1.bf16.msra.mxu0 %v373
        %447 = vmatprep.subr.bf16.mxu0 0
        %448 = vmatpush2.bf16.msra.mxu0 0
        %449 = vmatprep.subr.bf16.mxu0 0
        %450 = vmatpush2.bf16.msra.mxu0 0
        %451 = vmatprep.subr.bf16.mxu0 0
        %452 = vmatpush2.bf16.msra.mxu0 0
        %453 = vmatprep.subr.bf16.mxu0 0
        %454 = vmatpush2.bf16.msra.mxu0 0
        %455 = vmatprep.subr.bf16.mxu0 0
        %456 = vmatpush2.bf16.msra.mxu0 0
        %457 = vmatprep.subr.bf16.mxu0 0
        %458 = vmatpush2.bf16.msra.mxu0 0
        %459 = vmatprep.subr.bf16.mxu0 0
        %460 = vmatpush2.bf16.msra.mxu0 0
        %461 = vmatprep.subr.bf16.mxu0 0
        %462 = vmatpush2.bf16.msra.mxu0 0
        %463 = vmatprep.mubr.bf16.mxu0 0
        %464 = vmatmul.mubr.bf16.gmra.mxu0 %v380
        %v465 = vpop.f32.mrf.mxu0
        %v466 = vadd.f32 %v281, %v465
        %v467 = vpop.f32.mrf.mxu0
        %v468 = vpop.f32.mrf.mxu0
        %v469 = vadd.f32 %v281, %v468
        %v470 = vpop.f32.mrf.mxu0
        %471 = vmatprep.mubr.bf16.mxu0 0
        %472 = vmatmul.mubr.bf16.gmra.mxu0 %v383
        %v473 = vpop.f32.mrf.mxu0
        %v474 = vadd.f32 %v281, %v473
        %v475 = vpop.f32.mrf.mxu0
        %v476 = vpop.f32.mrf.mxu0
        %v477 = vadd.f32 %v281, %v476
        %v478 = vpop.f32.mrf.mxu0
        %479 = vmatprep.mubr.bf16.mxu0 0
        %480 = vmatmul.mubr.bf16.gmra.mxu0 %v386
        %v481 = vpop.f32.mrf.mxu0
        %v482 = vadd.f32 %v281, %v481
        %v483 = vpop.f32.mrf.mxu0
        %v484 = vpop.f32.mrf.mxu0
        %v485 = vadd.f32 %v281, %v484
        %v486 = vpop.f32.mrf.mxu0
        %487 = vmatprep.mubr.bf16.mxu0 0
        %488 = vmatmul.mubr.bf16.gmra.mxu0 %v389
        %v489 = vpop.f32.mrf.mxu0
        %v490 = vadd.f32 %v281, %v489
        %v491 = vpop.f32.mrf.mxu0
        %v492 = vpop.f32.mrf.mxu0
        %v493 = vadd.f32 %v281, %v492
        %v494 = vpop.f32.mrf.mxu0
        %495 = vmatprep.mubr.bf16.mxu0 0
        %496 = vmatmul.mubr.bf16.gmra.mxu0 %v392
        %v497 = vpop.f32.mrf.mxu0
        %v498 = vadd.f32 %v281, %v497
        %v499 = vpop.f32.mrf.mxu0
        %v500 = vpop.f32.mrf.mxu0
        %v501 = vadd.f32 %v281, %v500
        %v502 = vpop.f32.mrf.mxu0
        %503 = vmatprep.mubr.bf16.mxu0 0
        %504 = vmatmul.mubr.bf16.gmra.mxu0 %v395
        %v505 = vpop.f32.mrf.mxu0
        %v506 = vadd.f32 %v281, %v505
        %v507 = vpop.f32.mrf.mxu0
        %v508 = vpop.f32.mrf.mxu0
        %v509 = vadd.f32 %v281, %v508
        %v510 = vpop.f32.mrf.mxu0
        %511 = vmatprep.mubr.bf16.mxu0 0
        %512 = vmatmul.mubr.bf16.gmra.mxu0 %v398
        %v513 = vpop.f32.mrf.mxu0
        %v514 = vadd.f32 %v281, %v513
        %v515 = vpop.f32.mrf.mxu0
        %v516 = vpop.f32.mrf.mxu0
        %v517 = vadd.f32 %v281, %v516
        %v518 = vpop.f32.mrf.mxu0
        %519 = vmatprep.mubr.bf16.mxu0 0
        %520 = vmatmul.mubr.bf16.gmra.mxu0 %v401
        %v521 = vpop.f32.mrf.mxu0
        %v522 = vadd.f32 %v281, %v521
        %v523 = vpop.f32.mrf.mxu0
        %v524 = vpop.f32.mrf.mxu0
        %v525 = vadd.f32 %v281, %v524
        %v526 = vpop.f32.mrf.mxu0
        %527 = vmatprep.mubr.bf16.mxu0 0
        %528 = vmatmul.mubr.bf16.gmra.mxu0 %v404
        %v529 = vpop.f32.mrf.mxu0
        %v530 = vadd.f32 %v281, %v529
        %v531 = vpop.f32.mrf.mxu0
        %v532 = vpop.f32.mrf.mxu0
        %v533 = vadd.f32 %v281, %v532
        %v534 = vpop.f32.mrf.mxu0
        %535 = vmatprep.mubr.bf16.mxu0 0
        %536 = vmatmul.mubr.bf16.gmra.mxu0 %v407
        %v537 = vpop.f32.mrf.mxu0
        %v538 = vadd.f32 %v281, %v537
        %v539 = vpop.f32.mrf.mxu0
        %v540 = vpop.f32.mrf.mxu0
        %v541 = vadd.f32 %v281, %v540
        %v542 = vpop.f32.mrf.mxu0
        %543 = vmatprep.mubr.bf16.mxu0 0
        %544 = vmatmul.mubr.bf16.gmra.mxu0 %v410
        %v545 = vpop.f32.mrf.mxu0
        %v546 = vadd.f32 %v281, %v545
        %v547 = vpop.f32.mrf.mxu0
        %v548 = vpop.f32.mrf.mxu0
        %v549 = vadd.f32 %v281, %v548
        %v550 = vpop.f32.mrf.mxu0
        %551 = vmatprep.mubr.bf16.mxu0 0
        %552 = vmatmul.mubr.bf16.gmra.mxu0 %v413
        %v553 = vpop.f32.mrf.mxu0
        %v554 = vadd.f32 %v281, %v553
        %v555 = vpop.f32.mrf.mxu0
        %v556 = vpop.f32.mrf.mxu0
        %v557 = vadd.f32 %v281, %v556
        %v558 = vpop.f32.mrf.mxu0
        %559 = vmatprep.mubr.bf16.mxu0 0
        %560 = vmatmul.mubr.bf16.gmra.mxu0 %v416
        %v561 = vpop.f32.mrf.mxu0
        %v562 = vadd.f32 %v281, %v561
        %v563 = vpop.f32.mrf.mxu0
        %v564 = vpop.f32.mrf.mxu0
        %v565 = vadd.f32 %v281, %v564
        %v566 = vpop.f32.mrf.mxu0
        %567 = vmatprep.mubr.bf16.mxu0 0
        %568 = vmatmul.mubr.bf16.gmra.mxu0 %v419
        %v569 = vpop.f32.mrf.mxu0
        %v570 = vadd.f32 %v281, %v569
        %v571 = vpop.f32.mrf.mxu0
        %v572 = vpop.f32.mrf.mxu0
        %v573 = vadd.f32 %v281, %v572
        %v574 = vpop.f32.mrf.mxu0
        %575 = vmatprep.mubr.bf16.mxu0 0
        %576 = vmatmul.mubr.bf16.gmra.mxu0 %v422
        %v577 = vpop.f32.mrf.mxu0
        %v578 = vadd.f32 %v281, %v577
        %v579 = vpop.f32.mrf.mxu0
        %v580 = vpop.f32.mrf.mxu0
        %v581 = vadd.f32 %v281, %v580
        %v582 = vpop.f32.mrf.mxu0
        %583 = vmatprep.mubr.bf16.mxu0 0
        %584 = vmatmul.mubr.bf16.gmra.mxu0 %v425
        %v585 = vpop.f32.mrf.mxu0
        %v586 = vadd.f32 %v281, %v585
        %v587 = vpop.f32.mrf.mxu0
        %v588 = vpop.f32.mrf.mxu0
        %v589 = vadd.f32 %v281, %v588
        %v590 = vpop.f32.mrf.mxu0
        %591 = vdwg.mxu0
        %v592 = vmax.f32 %v466, 0.0
        %v593 = vmax.f32 %v469, 0.0
        %v594 = vmax.f32 %v474, 0.0
        %v595 = vmax.f32 %v477, 0.0
        %v596 = vmax.f32 %v482, 0.0
        %v597 = vmax.f32 %v485, 0.0
        %v598 = vmax.f32 %v490, 0.0
        %v599 = vmax.f32 %v493, 0.0
        %v600 = vmax.f32 %v498, 0.0
        %v601 = vmax.f32 %v501, 0.0
        %v602 = vmax.f32 %v506, 0.0
        %v603 = vmax.f32 %v509, 0.0
        %v604 = vmax.f32 %v514, 0.0
        %v605 = vmax.f32 %v517, 0.0
        %v606 = vmax.f32 %v522, 0.0
        %v607 = vmax.f32 %v525, 0.0
        %v608 = vmax.f32 %v530, 0.0
        %v609 = vmax.f32 %v533, 0.0
        %v610 = vmax.f32 %v538, 0.0
        %v611 = vmax.f32 %v541, 0.0
        %v612 = vmax.f32 %v546, 0.0
        %v613 = vmax.f32 %v549, 0.0
        %v614 = vmax.f32 %v554, 0.0
        %v615 = vmax.f32 %v557, 0.0
        %v616 = vmax.f32 %v562, 0.0
        %v617 = vmax.f32 %v565, 0.0
        %v618 = vmax.f32 %v570, 0.0
        %v619 = vmax.f32 %v573, 0.0
        %v620 = vmax.f32 %v578, 0.0
        %v621 = vmax.f32 %v581, 0.0
        %v622 = vmax.f32 %v586, 0.0
        %v623 = vmax.f32 %v589, 0.0
        %v624 = vld [vmem:[%s3] sm:$0x3]
        %v625 = vpack.c.bf16 %v593, %v592
        %v626 = vpack.c.bf16 %v595, %v594
        %v627 = vpack.c.bf16 %v597, %v596
        %v628 = vpack.c.bf16 %v599, %v598
        %v629 = vpack.c.bf16 %v601, %v600
        %v630 = vpack.c.bf16 %v603, %v602
        %v631 = vpack.c.bf16 %v605, %v604
        %v632 = vpack.c.bf16 %v607, %v606
        %v633 = vpack.c.bf16 %v609, %v608
        %v634 = vpack.c.bf16 %v611, %v610
        %v635 = vpack.c.bf16 %v613, %v612
        %v636 = vpack.c.bf16 %v615, %v614
        %v637 = vpack.c.bf16 %v617, %v616
        %v638 = vpack.c.bf16 %v619, %v618
        %v639 = vpack.c.bf16 %v621, %v620
        %v640 = vpack.c.bf16 %v623, %v622
        %v643 = vunpack.c.l.s4 1966171168
        %v644 = vunpack.c.0.s8 %v643
        %v645 = vlaneseq
        %v646 = vshrl.u32 %v645, 7
        %v647 = vsub.s32 %v644, %v646
        %v648 = vrot.slane %v624, %v647
        %v649 = vcombine.high %v648, %v648
        %v651 = vunpack.c.l.s4 1966171168
        %v652 = vunpack.c.0.s8 %v651
        %v653 = vlaneseq
        %v654 = vshrl.u32 %v653, 7
        %v655 = vsub.s32 %v652, %v654
        %v656 = vrot.slane %v648, %v655
        %v658 = vunpack.c.l.s4 1966171168
        %v659 = vunpack.c.0.s8 %v658
        %v660 = vlaneseq
        %v661 = vshrl.u32 %v660, 7
        %v662 = vsub.s32 %v659, %v661
        %v663 = vrot.slane %v649, %v662
        %666 = vmatprep.subr.bf16.mxu0 0
        %667 = vmatpush1.bf16.msra.mxu0 %v632
        %668 = vmatprep.subr.bf16.mxu0 0
        %669 = vmatpush1.bf16.msra.mxu0 %v631
        %670 = vmatprep.subr.bf16.mxu0 0
        %671 = vmatpush1.bf16.msra.mxu0 %v630
        %672 = vmatprep.subr.bf16.mxu0 0
        %673 = vmatpush1.bf16.msra.mxu0 %v629
        %674 = vmatprep.subr.bf16.mxu0 0
        %675 = vmatpush1.bf16.msra.mxu0 %v628
        %676 = vmatprep.subr.bf16.mxu0 0
        %677 = vmatpush1.bf16.msra.mxu0 %v627
        %678 = vmatprep.subr.bf16.mxu0 0
        %679 = vmatpush1.bf16.msra.mxu0 %v626
        %680 = vmatprep.subr.bf16.mxu0 0
        %681 = vmatpush1.bf16.msra.mxu0 %v625
        %682 = vmatprep.subr.bf16.mxu0 0
        %683 = vmatpush2.bf16.msra.mxu0 %v640
        %684 = vmatprep.subr.bf16.mxu0 0
        %685 = vmatpush2.bf16.msra.mxu0 %v639
        %686 = vmatprep.subr.bf16.mxu0 0
        %687 = vmatpush2.bf16.msra.mxu0 %v638
        %688 = vmatprep.subr.bf16.mxu0 0
        %689 = vmatpush2.bf16.msra.mxu0 %v637
        %690 = vmatprep.subr.bf16.mxu0 0
        %691 = vmatpush2.bf16.msra.mxu0 %v636
        %692 = vmatprep.subr.bf16.mxu0 0
        %693 = vmatpush2.bf16.msra.mxu0 %v635
        %694 = vmatprep.subr.bf16.mxu0 0
        %695 = vmatpush2.bf16.msra.mxu0 %v634
        %696 = vmatprep.subr.bf16.mxu0 0
        %697 = vmatpush2.bf16.msra.mxu0 %v633
        %698 = vmatprep.mubr.bf16.mxu0 %v663
        %699 = vmatmul.mubr.bf16.gmra.mxu0 %v656
        %v700 = vpop.f32.mrf.mxu0
        %v701 = vadd.f32 0.0, %v700
        %v702 = vpop.f32.mrf.mxu0
        %v703 = vpop.f32.mrf.mxu0
        %v704 = vpop.f32.mrf.mxu0
        %705 = vdwg.mxu0
        %v706 = vmul.f32 %v701, 0.00390625
        %s707 = scalar_lea.vmem [#allocation2], %s18
        %708 = vst [vmem:[%s707] sm:$0x1] %v706
        %p709 = scmp.eq.s32.totalorder %s18, 1
        // Predicated region
        $region45: #{baseline_forward.1} parent=43 // pred_check
          %p710 = pneg %p709
        $region46: #{baseline_forward.1} parent=43 // pred_check_branch
          %712 = sbr.rel (%p710) target = $region48
        $region47: #{baseline_forward.1} parent=43 // pred_region
          %v713 = vld [vmem:[#allocation2] sm:$0x3]
          %v714 = vpack.c.bf16 %v713, %v713
          %v715 = vld [vmem:[%s4] sm:$0xf]
          %v716 = vld [vmem:[%s4 + $0x4] sm:$0xf]
          %v717 = vld [vmem:[%s4 + $0x8] sm:$0xf]
          %v718 = vld [vmem:[%s4 + $0xc] sm:$0xf]
          %v719 = vld [vmem:[%s4 + $0x10] sm:$0xf]
          %v720 = vld [vmem:[%s4 + $0x14] sm:$0xf]
          %v721 = vld [vmem:[%s4 + $0x18] sm:$0xf]
          %v722 = vld [vmem:[%s4 + $0x1c] sm:$0xf]
          %v723 = vld [vmem:[%s4 + $0x20] sm:$0xf]
          %v724 = vld [vmem:[%s4 + $0x24] sm:$0xf]
          %v725 = vld [vmem:[%s4 + $0x28] sm:$0xf]
          %v726 = vld [vmem:[%s4 + $0x2c] sm:$0xf]
          %v727 = vld [vmem:[%s4 + $0x30] sm:$0xf]
          %v728 = vld [vmem:[%s4 + $0x34] sm:$0xf]
          %v729 = vld [vmem:[%s4 + $0x38] sm:$0xf]
          %v730 = vld [vmem:[%s4 + $0x3c] sm:$0xf]
          %v731 = vld [vmem:[%s5] sm:$0x1]
          %v733 = vlaneseq
          %v734 = vshrl.u32 %v733, 7
          %v735 = vsub.s32 0, %v734
          %v736 = vrot.slane %v731, %v735
          %v754 = vunpack.c.l.b16 %v715
          %v755 = vunpack.c.l.b16 %v716
          %v756 = vunpack.c.l.b16 %v717
          %v757 = vunpack.c.l.b16 %v718
          %v758 = vunpack.c.l.b16 %v719
          %v759 = vunpack.c.l.b16 %v720
          %v760 = vunpack.c.l.b16 %v721
          %v761 = vunpack.c.l.b16 %v722
          %v762 = vunpack.c.l.b16 %v723
          %v763 = vunpack.c.l.b16 %v724
          %v764 = vunpack.c.l.b16 %v725
          %v765 = vunpack.c.l.b16 %v726
          %v766 = vunpack.c.l.b16 %v727
          %v767 = vunpack.c.l.b16 %v728
          %v768 = vunpack.c.l.b16 %v729
          %v769 = vunpack.c.l.b16 %v730
          %v770 = vpack.c.b16 %v755, %v754
          %v771 = vpack.c.b16 %v757, %v756
          %v772 = vpack.c.b16 %v759, %v758
          %v773 = vpack.c.b16 %v761, %v760
          %v774 = vpack.c.b16 %v763, %v762
          %v775 = vpack.c.b16 %v765, %v764
          %v776 = vpack.c.b16 %v767, %v766
          %v777 = vpack.c.b16 %v769, %v768
          %786 = vmatprep.subr.bf16.mxu0 0
          %787 = vmatpush1.bf16.msra.mxu0 %v777
          %788 = vmatprep.subr.bf16.mxu0 0
          %789 = vmatpush1.bf16.msra.mxu0 %v776
          %790 = vmatprep.subr.bf16.mxu0 0
          %791 = vmatpush1.bf16.msra.mxu0 %v775
          %792 = vmatprep.subr.bf16.mxu0 0
          %793 = vmatpush1.bf16.msra.mxu0 %v774
          %794 = vmatprep.subr.bf16.mxu0 0
          %795 = vmatpush1.bf16.msra.mxu0 %v773
          %796 = vmatprep.subr.bf16.mxu0 0
          %797 = vmatpush1.bf16.msra.mxu0 %v772
          %798 = vmatprep.subr.bf16.mxu0 0
          %799 = vmatpush1.bf16.msra.mxu0 %v771
          %800 = vmatprep.subr.bf16.mxu0 0
          %801 = vmatpush1.bf16.msra.mxu0 %v770
          %802 = vmatprep.subr.bf16.mxu0 0
          %803 = vmatpush2.bf16.msra.mxu0 0
          %804 = vmatprep.subr.bf16.mxu0 0
          %805 = vmatpush2.bf16.msra.mxu0 0
          %806 = vmatprep.subr.bf16.mxu0 0
          %807 = vmatpush2.bf16.msra.mxu0 0
          %808 = vmatprep.subr.bf16.mxu0 0
          %809 = vmatpush2.bf16.msra.mxu0 0
          %810 = vmatprep.subr.bf16.mxu0 0
          %811 = vmatpush2.bf16.msra.mxu0 0
          %812 = vmatprep.subr.bf16.mxu0 0
          %813 = vmatpush2.bf16.msra.mxu0 0
          %814 = vmatprep.subr.bf16.mxu0 0
          %815 = vmatpush2.bf16.msra.mxu0 0
          %816 = vmatprep.subr.bf16.mxu0 0
          %817 = vmatpush2.bf16.msra.mxu0 0
          %818 = vmatprep.mubr.bf16.mxu0 0
          %819 = vmatmul.mubr.bf16.gmra.mxu0 %v714
          %v820 = vpop.f32.mrf.mxu0
          %v821 = vadd.f32 %v736, %v820
          %v822 = vpop.f32.mrf.mxu0
          %v823 = vpop.f32.mrf.mxu0
          %v824 = vpop.f32.mrf.mxu0
          %825 = vdwg.mxu0
          %826 = vst [vmem:[#allocation3] sm:$0x3] %v821
        $region48: #{baseline_forward.1} parent=43 // pred_fallthru
          _
        // Predicated region
        $region49: #{baseline_forward.1} parent=43 // pred_check
          %p827 = pneg %p162
        $region50: #{baseline_forward.1} parent=43 // pred_check_branch
          %829 = sbr.rel (%p827) target = $region52
        $region51: #{baseline_forward.1} parent=43 // pred_region
          %s831 = ssub.s32 32, 32
          %832 = vsyncadd [#allocation4], %s831
          %s834 = sshll.u32 [#allocation3], 4
          %s835 = int_to_ptr.vmem [resolvable:$true] %s834
          %837 = dma.vmem_to_hbm [thread:$0]  %s835, 32, %s6, [#allocation4]
        $region52: #{baseline_forward.1} parent=43 // pred_fallthru
          _
        // Predicated region
        $region53: #{baseline_forward.1} parent=43 // pred_check
          %p838 = pneg %p162
        $region54: #{baseline_forward.1} parent=43 // pred_check_branch
          %840 = sbr.rel (%p838) target = $region56
        $region55: #{baseline_forward.1} parent=43 // pred_region
          %841 = dma.done [#allocation4], 32
        $region56: #{baseline_forward.1} parent=43 // pred_fallthru
          _
      $region44: #{baseline_forward.1} parent=5 // pred_fallthru
        _
      %p842 = scmp.le.s32.totalorder 2, %s13
      // Predicated region
      $region57: #{baseline_forward.1} parent=5 // pred_check
        %p843 = pneg %p842
      $region58: #{baseline_forward.1} parent=5 // pred_check_branch
        %845 = sbr.rel (%p843) target = $region60
      $region59: #{baseline_forward.1} parent=5 // pred_region
        %s846 = ssub.s32 %s13, 2
      $region60: #{baseline_forward.1} parent=5 // pred_fallthru
        _
    $region6: #{baseline_forward.1} parent=1 // loop_footer
      %s17 = sadd.s32 1, %s13
    $region7: #{baseline_forward.1} parent=1 // loop_footer_branch
      %12 = sbr.rel target = $region3
    $region8: #{baseline_forward.1} parent=1 // loop_exit
      _
    %847 = vsyncpa [#allocation4], 1
    %s848 = scalar_lea.sflag [#allocation4], 1
    %849 = vsyncpa %s848, 1

</llo_original>
